<compile_context>
chip_gen: v7x
topology: tpu7x:2x2x1
jax: 0.10.0
libtpu: 0.0.40
codegen_flags: <defaults>
</compile_context>

<pallas_src>
import functools

import jax
import jax.numpy as jnp
from jax import lax
from jax.experimental import pallas as pl
from jax.experimental.pallas import tpu as pltpu

_LANES = 128
_MAX_TILE_ROWS = 2048  # (2048, 128) f32 = 1 MiB per input per grid step


def _balanced_bce_kernel(pred_ref, gt_ref, out_ref,
                         loss_acc, pos_loss_acc, pos_cnt_acc,
                         *, pos_thresh, n_valid, tail_rem, has_tail):
    i = pl.program_id(0)
    last = pl.num_programs(0) - 1
    tile_rows, lanes = pred_ref.shape

    @pl.when(i == 0)
    def _init():
        loss_acc[...] = jnp.zeros_like(loss_acc)
        pos_loss_acc[...] = jnp.zeros_like(pos_loss_acc)
        pos_cnt_acc[...] = jnp.zeros_like(pos_cnt_acc)

    def accumulate(valid_mask):
        pred = pred_ref[...].astype(jnp.float32)
        gt = gt_ref[...].astype(jnp.float32)

        is_pos = gt > pos_thresh
        # Single log per element: BCE with a {0,1} target is -log(pred) for
        # positives and -log(1 - pred) for negatives, log clamped at -100.
        x = jnp.where(is_pos, pred, 1.0 - pred)
        if valid_mask is not None:
            x = jnp.where(valid_mask, x, 1.0)  # pad / OOB garbage -> log(1) = 0
            pos = jnp.logical_and(valid_mask, is_pos)
        else:
            pos = is_pos
        l = -jnp.maximum(jnp.log(x), -100.0)

        pos_l = jnp.where(pos, l, 0.0)
        pos_c = pos.astype(jnp.float32)

        # Reduce the whole tile along sublanes to (1, 128) partials; lane
        # reduction is deferred to the finalize step.
        loss_acc[...] += jnp.sum(l, axis=0, keepdims=True)
        pos_loss_acc[...] += jnp.sum(pos_l, axis=0, keepdims=True)
        pos_cnt_acc[...] += jnp.sum(pos_c, axis=0, keepdims=True)

    if has_tail:
        @pl.when(i != last)
        def _full_blocks():
            accumulate(None)

        @pl.when(i == last)
        def _tail_block():
            row_ids = lax.broadcasted_iota(jnp.int32, (tile_rows, lanes), 0)
            lane_ids = lax.broadcasted_iota(jnp.int32, (tile_rows, lanes), 1)
            accumulate(row_ids * lanes + lane_ids < tail_rem)
    else:
        accumulate(None)

    @pl.when(i == last)
    def _finalize():
        sum_loss = jnp.sum(loss_acc[...])
        sum_pos_loss = jnp.sum(pos_loss_acc[...])
        num_pos = jnp.sum(pos_cnt_acc[...])

        n_tot = jnp.float32(n_valid)
        num_neg = n_tot - num_pos
        sum_neg_loss = sum_loss - sum_pos_loss

        mean_loss = sum_loss / n_tot
        coef_pos = 0.5 * n_tot / jnp.maximum(num_pos, 1.0)
        coef_neg = 0.5 * n_tot / jnp.maximum(num_neg, 1.0)
        balanced = (coef_pos * sum_pos_loss + coef_neg * sum_neg_loss) / n_tot

        degenerate = jnp.logical_or(num_pos == 0.0, num_neg == 0.0)
        out_ref[0] = jnp.where(degenerate, mean_loss, balanced)


def balanced_bce_loss(pred, gt, pos_thresh=0.5, block_rows=None):
    assert pred.shape == gt.shape
    n = int(pred.size)
    assert n > 0
    if block_rows is None:
        block_rows = _MAX_TILE_ROWS

    flat_pred = pred.reshape(-1)
    flat_gt = gt.reshape(-1)

    # Minimal padding (<= 127 elements) so the flat array reshapes to lanes of
    # 128; padded / out-of-bounds elements are masked out in-kernel.
    rows = pl.cdiv(n, _LANES)
    n_pad = rows * _LANES
    if n_pad != n:
        flat_pred = jnp.pad(flat_pred, (0, n_pad - n))
        flat_gt = jnp.pad(flat_gt, (0, n_pad - n))

    pred2 = flat_pred.reshape(rows, _LANES)
    gt2 = flat_gt.reshape(rows, _LANES)

    # Full-array block for small inputs; big streaming tiles for large ones.
    if rows <= block_rows:
        tile_rows = rows
    else:
        assert block_rows % 8 == 0, "tiled block_rows must be a multiple of 8"
        tile_rows = block_rows
    tile_elems = tile_rows * _LANES
    grid = pl.cdiv(rows, tile_rows)

    # Only the last grid step can contain padded / out-of-bounds elements.
    tail_rem = n - (grid - 1) * tile_elems
    assert 0 < tail_rem <= tile_elems
    has_tail = tail_rem < tile_elems

    kernel = functools.partial(
        _balanced_bce_kernel,
        pos_thresh=float(pos_thresh),
        n_valid=n,
        tail_rem=int(tail_rem),
        has_tail=bool(has_tail),
    )
    tile_spec = lambda: pl.BlockSpec((tile_rows, _LANES), lambda i: (i, 0))

    out = pl.pallas_call(
        kernel,
        out_shape=jax.ShapeDtypeStruct((1,), jnp.float32),
        grid_spec=pltpu.PrefetchScalarGridSpec(
            num_scalar_prefetch=0,
            grid=(grid,),
            in_specs=[tile_spec(), tile_spec()],
            out_specs=pl.BlockSpec(memory_space=pltpu.MemorySpace.SMEM),
            scratch_shapes=[pltpu.VMEM((1, _LANES), jnp.float32)] * 3,
        ),
        compiler_params=pltpu.CompilerParams(
            dimension_semantics=("arbitrary",),
            vmem_limit_bytes=32 * 1024 * 1024,
        ),
    )(pred2, gt2)
    return out[0]


def _reference(pred, gt, pos_thresh=0.5):
    pred = pred.astype(jnp.float32)
    gt = gt.astype(jnp.float32)
    pmask = (gt > pos_thresh).astype(jnp.float32)
    nmask = (gt <= pos_thresh).astype(jnp.float32)
    log_p = jnp.maximum(jnp.log(pred), -100.0)
    log_1mp = jnp.maximum(jnp.log(1.0 - pred), -100.0)
    loss = -(pmask * log_p + nmask * log_1mp)
    num_pos = pmask.sum()
    num_neg = nmask.sum()
    mean_loss = loss.mean()
    coef_pos = 0.5 * (num_pos + num_neg) / jnp.maximum(num_pos, 1.0)
    coef_neg = 0.5 * (num_pos + num_neg) / jnp.maximum(num_neg, 1.0)
    balanced = ((coef_pos * pmask + coef_neg * nmask) * loss).mean()
    return jnp.where((num_pos == 0.0) | (num_neg == 0.0), mean_loss, balanced)


if __name__ == "__main__":
    key = jax.random.PRNGKey(0)
    k1, k2, k3, k4 = jax.random.split(key, 4)

    # Case 1: lane-aligned input, single full block (no tail mask path).
    pred1 = jax.random.uniform(k1, (2, 4, 256), jnp.float32,
                               minval=1e-3, maxval=1.0 - 1e-3)
    gt1 = jax.random.uniform(k2, (2, 4, 256), jnp.float32)
    out1 = jax.block_until_ready(balanced_bce_loss(pred1, gt1, pos_thresh=0.5))
    ref1 = _reference(pred1, gt1, pos_thresh=0.5)
    assert jnp.allclose(out1, ref1, rtol=1e-5, atol=1e-5), (out1, ref1)

    # Case 2: non-multiple-of-128 size + forced multi-step grid
    # (exercises init, mask-free full blocks, masked tail block, finalize).
    pred2 = jax.random.uniform(k3, (2, 4, 500), jnp.float32,
                               minval=1e-3, maxval=1.0 - 1e-3)
    gt2 = jax.random.uniform(k4, (2, 4, 500), jnp.float32)
    out2 = jax.block_until_ready(
        balanced_bce_loss(pred2, gt2, pos_thresh=0.5, block_rows=8))
    ref2 = _reference(pred2, gt2, pos_thresh=0.5)
    assert jnp.allclose(out2, ref2, rtol=1e-5, atol=1e-5), (out2, ref2)

    # Case 3: degenerate (no positives) -> plain mean branch.
    gt3 = jnp.zeros_like(gt1)
    out3 = jax.block_until_ready(balanced_bce_loss(pred1, gt3, pos_thresh=0.5))
    ref3 = _reference(pred1, gt3, pos_thresh=0.5)
    assert jnp.allclose(out3, ref3, rtol=1e-5, atol=1e-5), (out3, ref3)

    print("KERNEL_OK")
</pallas_src>

<mosaic_0001>
module attributes {stable_mosaic.version = 11 : i64} {
  func.func @_balanced_bce_kernel(%arg0: i32, %arg1: memref<16x128xf32, #tpu.memory_space<vmem>>, %arg2: memref<16x128xf32, #tpu.memory_space<vmem>>, %arg3: memref<1xf32, #tpu.memory_space<smem>>, %arg4: memref<1x128xf32, #tpu.memory_space<vmem>>, %arg5: memref<1x128xf32, #tpu.memory_space<vmem>>, %arg6: memref<1x128xf32, #tpu.memory_space<vmem>>) attributes {dimension_semantics = [#tpu.dimension_semantics<arbitrary>], iteration_bounds = array<i64: 1>, scalar_prefetch = 0 : i64, scratch_operands = 3 : i64, tpu.core_type = #tpu.core_type<tc>, window_params = [{transform_indices = @transform_0, window_bounds = array<i64: 16, 128>}, {transform_indices = @transform_1, window_bounds = array<i64: 16, 128>}, {transform_indices = @transform_2, window_bounds = array<i64: 1>}]} {
    %c0_i32 = arith.constant 0 : i32
    %0 = arith.cmpi eq, %arg0, %c0_i32 : i32
    %1 = arith.extui %0 : i1 to i32
    %c0_i32_0 = arith.constant 0 : i32
    %2 = arith.cmpi ne, %1, %c0_i32_0 : i32
    scf.if %2 {
      %cst_25 = arith.constant 0.000000e+00 : f32
      %37 = vector.broadcast %cst_25 : f32 to vector<1x128xf32>
      %c0_26 = arith.constant 0 : index
      %c0_27 = arith.constant 0 : index
      %38 = vector.load %arg4[%c0_26, %c0_27] : memref<1x128xf32, #tpu.memory_space<vmem>>, vector<1x128xf32>
      tpu.vector_store %arg4[%c0_26, %c0_27], %37 {strides = array<i32>} : memref<1x128xf32, #tpu.memory_space<vmem>>, vector<1x128xf32>,
      %cst_28 = arith.constant 0.000000e+00 : f32
      %39 = vector.broadcast %cst_28 : f32 to vector<1x128xf32>
      %c0_29 = arith.constant 0 : index
      %c0_30 = arith.constant 0 : index
      %40 = vector.load %arg5[%c0_29, %c0_30] : memref<1x128xf32, #tpu.memory_space<vmem>>, vector<1x128xf32>
      tpu.vector_store %arg5[%c0_29, %c0_30], %39 {strides = array<i32>} : memref<1x128xf32, #tpu.memory_space<vmem>>, vector<1x128xf32>,
      %cst_31 = arith.constant 0.000000e+00 : f32
      %41 = vector.broadcast %cst_31 : f32 to vector<1x128xf32>
      %c0_32 = arith.constant 0 : index
      %c0_33 = arith.constant 0 : index
      %42 = vector.load %arg6[%c0_32, %c0_33] : memref<1x128xf32, #tpu.memory_space<vmem>>, vector<1x128xf32>
      tpu.vector_store %arg6[%c0_32, %c0_33], %41 {strides = array<i32>} : memref<1x128xf32, #tpu.memory_space<vmem>>, vector<1x128xf32>,
    } else {
    }
    %c0 = arith.constant 0 : index
    %c0_1 = arith.constant 0 : index
    %3 = vector.load %arg1[%c0, %c0_1] : memref<16x128xf32, #tpu.memory_space<vmem>>, vector<16x128xf32>
    %c0_2 = arith.constant 0 : index
    %c0_3 = arith.constant 0 : index
    %4 = vector.load %arg2[%c0_2, %c0_3] : memref<16x128xf32, #tpu.memory_space<vmem>>, vector<16x128xf32>
    %cst = arith.constant 5.000000e-01 : f32
    %5 = vector.broadcast %cst : f32 to vector<16x128xf32>
    %6 = arith.cmpf ogt, %4, %5 : vector<16x128xf32>
    %cst_4 = arith.constant 1.000000e+00 : f32
    %7 = vector.broadcast %cst_4 : f32 to vector<16x128xf32>
    %8 = arith.subf %7, %3 : vector<16x128xf32>
    %9 = arith.select %6, %3, %8 : vector<16x128xi1>, vector<16x128xf32>
    %10 = math.log %9 : vector<16x128xf32>
    %cst_5 = arith.constant -1.000000e+02 : f32
    %11 = vector.broadcast %cst_5 : f32 to vector<16x128xf32>
    %12 = arith.maximumf %10, %11 : vector<16x128xf32>
    %cst_6 = arith.constant 0.000000e+00 : f32
    %13 = vector.broadcast %cst_6 : f32 to vector<16x128xf32>
    %14 = arith.subf %13, %12 : vector<16x128xf32>
    %cst_7 = arith.constant 0.000000e+00 : f32
    %15 = vector.broadcast %cst_7 : f32 to vector<16x128xf32>
    %16 = arith.select %6, %14, %15 : vector<16x128xi1>, vector<16x128xf32>
    %17 = arith.extui %6 : vector<16x128xi1> to vector<16x128xi32>
    %18 = arith.sitofp %17 : vector<16x128xi32> to vector<16x128xf32>
    %c0_8 = arith.constant 0 : index
    %c0_9 = arith.constant 0 : index
    %19 = vector.load %arg4[%c0_8, %c0_9] : memref<1x128xf32, #tpu.memory_space<vmem>>, vector<1x128xf32>
    %cst_10 = arith.constant dense<0.000000e+00> : vector<128xf32>
    %20 = vector.multi_reduction <add>, %14, %cst_10 [0] : vector<16x128xf32> to vector<128xf32>
    %21 = vector.shape_cast %20 : vector<128xf32> to vector<1x128xf32>
    %22 = arith.addf %19, %21 : vector<1x128xf32>
    %c0_11 = arith.constant 0 : index
    %c0_12 = arith.constant 0 : index
    %23 = vector.load %arg4[%c0_11, %c0_12] : memref<1x128xf32, #tpu.memory_space<vmem>>, vector<1x128xf32>
    tpu.vector_store %arg4[%c0_11, %c0_12], %22 {strides = array<i32>} : memref<1x128xf32, #tpu.memory_space<vmem>>, vector<1x128xf32>,
    %c0_13 = arith.constant 0 : index
    %c0_14 = arith.constant 0 : index
    %24 = vector.load %arg5[%c0_13, %c0_14] : memref<1x128xf32, #tpu.memory_space<vmem>>, vector<1x128xf32>
    %cst_15 = arith.constant dense<0.000000e+00> : vector<128xf32>
    %25 = vector.multi_reduction <add>, %16, %cst_15 [0] : vector<16x128xf32> to vector<128xf32>
    %26 = vector.shape_cast %25 : vector<128xf32> to vector<1x128xf32>
    %27 = arith.addf %24, %26 : vector<1x128xf32>
    %c0_16 = arith.constant 0 : index
    %c0_17 = arith.constant 0 : index
    %28 = vector.load %arg5[%c0_16, %c0_17] : memref<1x128xf32, #tpu.memory_space<vmem>>, vector<1x128xf32>
    tpu.vector_store %arg5[%c0_16, %c0_17], %27 {strides = array<i32>} : memref<1x128xf32, #tpu.memory_space<vmem>>, vector<1x128xf32>,
    %c0_18 = arith.constant 0 : index
    %c0_19 = arith.constant 0 : index
    %29 = vector.load %arg6[%c0_18, %c0_19] : memref<1x128xf32, #tpu.memory_space<vmem>>, vector<1x128xf32>
    %cst_20 = arith.constant dense<0.000000e+00> : vector<128xf32>
    %30 = vector.multi_reduction <add>, %18, %cst_20 [0] : vector<16x128xf32> to vector<128xf32>
    %31 = vector.shape_cast %30 : vector<128xf32> to vector<1x128xf32>
    %32 = arith.addf %29, %31 : vector<1x128xf32>
    %c0_21 = arith.constant 0 : index
    %c0_22 = arith.constant 0 : index
    %33 = vector.load %arg6[%c0_21, %c0_22] : memref<1x128xf32, #tpu.memory_space<vmem>>, vector<1x128xf32>
    tpu.vector_store %arg6[%c0_21, %c0_22], %32 {strides = array<i32>} : memref<1x128xf32, #tpu.memory_space<vmem>>, vector<1x128xf32>,
    %c0_i32_23 = arith.constant 0 : i32
    %34 = arith.cmpi eq, %arg0, %c0_i32_23 : i32
    %35 = arith.extui %34 : i1 to i32
    %c0_i32_24 = arith.constant 0 : i32
    %36 = arith.cmpi ne, %35, %c0_i32_24 : i32
    scf.if %36 {
      %c0_25 = arith.constant 0 : index
      %c0_26 = arith.constant 0 : index
      %37 = vector.load %arg4[%c0_25, %c0_26] : memref<1x128xf32, #tpu.memory_space<vmem>>, vector<1x128xf32>
      %38 = vector.shape_cast %37 : vector<1x128xf32> to vector<1x1x128xf32>
      %cst_27 = arith.constant dense<0.000000e+00> : vector<1xf32>
      %39 = vector.multi_reduction <add>, %38, %cst_27 [1, 2] : vector<1x1x128xf32> to vector<1xf32>
      %40 = vector.shape_cast %39 : vector<1xf32> to vector<1x1x1xf32>
      %41 = vector.extract %40[0, 0, 0] : f32 from vector<1x1x1xf32>
      %c0_28 = arith.constant 0 : index
      %c0_29 = arith.constant 0 : index
      %42 = vector.load %arg5[%c0_28, %c0_29] : memref<1x128xf32, #tpu.memory_space<vmem>>, vector<1x128xf32>
      %43 = vector.shape_cast %42 : vector<1x128xf32> to vector<1x1x128xf32>
      %cst_30 = arith.constant dense<0.000000e+00> : vector<1xf32>
      %44 = vector.multi_reduction <add>, %43, %cst_30 [1, 2] : vector<1x1x128xf32> to vector<1xf32>
      %45 = vector.shape_cast %44 : vector<1xf32> to vector<1x1x1xf32>
      %46 = vector.extract %45[0, 0, 0] : f32 from vector<1x1x1xf32>
      %c0_31 = arith.constant 0 : index
      %c0_32 = arith.constant 0 : index
      %47 = vector.load %arg6[%c0_31, %c0_32] : memref<1x128xf32, #tpu.memory_space<vmem>>, vector<1x128xf32>
      %48 = vector.shape_cast %47 : vector<1x128xf32> to vector<1x1x128xf32>
      %cst_33 = arith.constant dense<0.000000e+00> : vector<1xf32>
      %49 = vector.multi_reduction <add>, %48, %cst_33 [1, 2] : vector<1x1x128xf32> to vector<1xf32>
      %50 = vector.shape_cast %49 : vector<1xf32> to vector<1x1x1xf32>
      %51 = vector.extract %50[0, 0, 0] : f32 from vector<1x1x1xf32>
      %cst_34 = arith.constant 2.048000e+03 : f32
      %52 = arith.subf %cst_34, %51 : f32
      %53 = arith.subf %41, %46 : f32
      %cst_35 = arith.constant 2.048000e+03 : f32
      %54 = arith.divf %41, %cst_35 : f32
      %cst_36 = arith.constant 5.000000e-01 : f32
      %cst_37 = arith.constant 2.048000e+03 : f32
      %55 = arith.mulf %cst_36, %cst_37 : f32
      %cst_38 = arith.constant 1.000000e+00 : f32
      %56 = arith.maximumf %51, %cst_38 : f32
      %57 = arith.divf %55, %56 : f32
      %cst_39 = arith.constant 5.000000e-01 : f32
      %cst_40 = arith.constant 2.048000e+03 : f32
      %58 = arith.mulf %cst_39, %cst_40 : f32
      %cst_41 = arith.constant 1.000000e+00 : f32
      %59 = arith.maximumf %52, %cst_41 : f32
      %60 = arith.divf %58, %59 : f32
      %61 = arith.mulf %57, %46 : f32
      %62 = arith.mulf %60, %53 : f32
      %63 = arith.addf %61, %62 : f32
      %cst_42 = arith.constant 2.048000e+03 : f32
      %64 = arith.divf %63, %cst_42 : f32
      %cst_43 = arith.constant 0.000000e+00 : f32
      %65 = arith.cmpf oeq, %51, %cst_43 : f32
      %cst_44 = arith.constant 0.000000e+00 : f32
      %66 = arith.cmpf oeq, %52, %cst_44 : f32
      %67 = arith.ori %65, %66 : i1
      %68 = arith.select %67, %54, %64 : f32
      %c0_45 = arith.constant 0 : index
      %69 = memref.load %arg3[%c0_45] : memref<1xf32, #tpu.memory_space<smem>>
      memref.store %68, %arg3[%c0_45] : memref<1xf32, #tpu.memory_space<smem>>
    } else {
    }
    return
  }
  func.func @transform_0(%arg0: i32) -> (i32, i32) {
    %c0_i32 = arith.constant 0 : i32
    %c0_i32_0 = arith.constant 0 : i32
    return %arg0, %c0_i32 : i32, i32
  }
  func.func @transform_1(%arg0: i32) -> (i32, i32) {
    %c0_i32 = arith.constant 0 : i32
    %c0_i32_0 = arith.constant 0 : i32
    return %arg0, %c0_i32 : i32, i32
  }
  func.func @transform_2(%arg0: i32) -> i32 {
    %c0_i32 = arith.constant 0 : i32
    %c0_i32_0 = arith.constant 0 : i32
    return %c0_i32 : i32
  }
}

</mosaic_0001>

<llo_original>
// kernel: tpu_custom_call.1
$region0: #{tpu_custom_call.1}
  #allocation0 [shape = 'u32[]', space=smem, size = 0x4, offset = 0x4, fixed_abs, tag = 'smem constant byte address 0x4 - core index']
  #allocation1 [shape = 'u32[144,128]{1,0:T(1,128)}', space=vmem, size = 0x12000, scoped, tag = 'internal scratch']
  #allocation2 [shape = 'f32[1,128]{1,0:T(1,128)}', space=vmem, size = 0x200, scoped, tag = 'scratch operand']
  #allocation3 [shape = 'f32[1,128]{1,0:T(1,128)}', space=vmem, size = 0x200, scoped, tag = 'scratch operand']
  #allocation4 [shape = 'f32[1,128]{1,0:T(1,128)}', space=vmem, size = 0x200, scoped, tag = 'scratch operand']
  %s0 = inlined_call_operand.hbm [shape: f32[16,128], index: 0, kind: input, shape index: {}]
  %s1 = inlined_call_operand.hbm [shape: f32[16,128], index: 1, kind: input, shape index: {}]
  %s2 = inlined_call_operand.hbm [shape: f32[1], index: 2, kind: output, shape index: {}]
  %s3 = sld [smem:[#allocation0]]
  $region34: #{tpu_custom_call.1} parent=0
    _
  %s5 = ssub.s32 1, %s3
  %s6 = scalar_select 0, %s5, %s3
  $region1: #{tpu_custom_call.1} parent=0
    #allocation5 [shape = 'u8[8192]{0}', space=vmem, size = 0x2000, scoped, tag = 'input window, operand 0, single buffered']
    #allocation6 [shape = 's32[1]{0}', space=sflag, size = 0x4, scoped, tag = 'scoped memory for tpu_custom_call.1']
    #allocation7 [shape = 's32[1]{0}', space=sflag, size = 0x4, scoped, tag = 'scoped memory for tpu_custom_call.1']
    #allocation8 [shape = 'u8[8192]{0}', space=vmem, size = 0x2000, scoped, tag = 'input window, operand 1, single buffered']
    #allocation9 [shape = 's32[1]{0}', space=sflag, size = 0x4, scoped, tag = 'scoped memory for tpu_custom_call.1']
    #allocation10 [shape = 'u8[512]{0}', space=smem, size = 0x200, scoped, tag = 'output window, operand 0, single buffered']
    %7 = vsyncpa [#allocation6], 0
    %8 = vsyncpa [#allocation9], 0
    %9 = vsyncpa [#allocation7], 0
    // Predicated region
    $region2: #{tpu_custom_call.1} parent=1 // pred_check
      _
    $region3: #{tpu_custom_call.1} parent=1 // pred_check_branch
      %11 = sbr.rel (0) target = $region5
    $region4: #{tpu_custom_call.1} parent=1 // pred_region
      %s13 = ssub.s32 256, 256
      %14 = vsyncadd [#allocation6], %s13
      %s15 = sshll.u32 [#allocation5], 4
      %s16 = int_to_ptr.vmem [resolvable:$true] %s15
      %21 = dma.hbm_to_vmem [thread:$0]  %s0, 256, %s16, [#allocation6], 128, 128, 8
    $region5: #{tpu_custom_call.1} parent=1 // pred_fallthru
      _
    // Predicated region
    $region6: #{tpu_custom_call.1} parent=1 // pred_check
      _
    $region7: #{tpu_custom_call.1} parent=1 // pred_check_branch
      %23 = sbr.rel (0) target = $region9
    $region8: #{tpu_custom_call.1} parent=1 // pred_region
      %s25 = ssub.s32 256, 256
      %26 = vsyncadd [#allocation9], %s25
      %s27 = sshll.u32 [#allocation8], 4
      %s28 = int_to_ptr.vmem [resolvable:$true] %s27
      %33 = dma.hbm_to_vmem [thread:$0]  %s1, 256, %s28, [#allocation9], 128, 128, 8
    $region9: #{tpu_custom_call.1} parent=1 // pred_fallthru
      _
    // Predicated region
    $region10: #{tpu_custom_call.1} parent=1 // pred_check
      _
    $region11: #{tpu_custom_call.1} parent=1 // pred_check_branch
      %35 = sbr.rel (0) target = $region13
    $region12: #{tpu_custom_call.1} parent=1 // pred_region
      %36 = dma.done [#allocation6], 256
    $region13: #{tpu_custom_call.1} parent=1 // pred_fallthru
      _
    // Predicated region
    $region14: #{tpu_custom_call.1} parent=1 // pred_check
      _
    $region15: #{tpu_custom_call.1} parent=1 // pred_check_branch
      %38 = sbr.rel (0) target = $region17
    $region16: #{tpu_custom_call.1} parent=1 // pred_region
      %39 = dma.done [#allocation9], 256
    $region17: #{tpu_custom_call.1} parent=1 // pred_fallthru
      _
    %p40 = scmp.eq.s32.totalorder 0, 0
    // Predicated region
    $region18: #{tpu_custom_call.1} parent=1 // pred_check
      %p41 = pneg %p40
    $region19: #{tpu_custom_call.1} parent=1 // pred_check_branch
      %43 = sbr.rel (%p41) target = $region21
    $region20: #{tpu_custom_call.1} parent=1 // pred_region
      %44 = vst [vmem:[#allocation2] sm:$0x1] 0.0
      %45 = vst [vmem:[#allocation3] sm:$0x1] 0.0
      %46 = vst [vmem:[#allocation4] sm:$0x1] 0.0
    $region21: #{tpu_custom_call.1} parent=1 // pred_fallthru
      _
    %v47 = vld [vmem:[#allocation5] sm:$0xff]
    %v48 = vld [vmem:[#allocation5 + $0x8] sm:$0xff]
    %v49 = vld [vmem:[#allocation8] sm:$0xff]
    %v50 = vld [vmem:[#allocation8 + $0x8] sm:$0xff]
    %vm51 = vcmp.gt.f32.partialorder %v49, 0.5
    %vm52 = vcmp.gt.f32.partialorder %v50, 0.5
    %v53 = vsub.f32 1.0, %v47
    %v54 = vsub.f32 1.0, %v48
    %v55 = vsel %vm51, %v47, %v53
    %v56 = vsel %vm52, %v48, %v54
    %v57 = vlog2.pop %v55
    %v58 = vmul.f32 %v57, 0.6931472
    %v59 = vlog2.pop %v56
    %v60 = vmul.f32 %v59, 0.6931472
    %v61 = vmax.f32 %v58, -100.0
    %v62 = vmax.f32 %v60, -100.0
    %v63 = vsub.f32 0.0, %v61
    %v64 = vsub.f32 0.0, %v62
    %v65 = vsel %vm51, %v63, 0.0
    %v66 = vsel %vm52, %v64, 0.0
    %v67 = vsel %vm51, 1, 0
    %v68 = vsel %vm52, 1, 0
    %v69 = vcvt.s32.f32 %v67
    %v70 = vcvt.s32.f32 %v68
    %v71 = vld [vmem:[#allocation2] sm:$0x1]
    %v72 = vadd.f32 %v63, %v64
    %v73 = vrot.slane %v72, 4
    %v74 = vadd.f32 %v72, %v73
    %v75 = vrot.slane %v74, 2
    %v76 = vadd.f32 %v74, %v75
    %v77 = vrot.slane %v76, 1
    %v78 = vadd.f32 %v76, %v77
    %v79 = vadd.f32 %v71, %v78
    %80 = vst [vmem:[#allocation2] sm:$0x1] %v79
    %v81 = vld [vmem:[#allocation3] sm:$0x1]
    %v82 = vadd.f32 %v65, %v66
    %v83 = vrot.slane %v82, 4
    %v84 = vadd.f32 %v82, %v83
    %v85 = vrot.slane %v84, 2
    %v86 = vadd.f32 %v84, %v85
    %v87 = vrot.slane %v86, 1
    %v88 = vadd.f32 %v86, %v87
    %v89 = vadd.f32 %v81, %v88
    %90 = vst [vmem:[#allocation3] sm:$0x1] %v89
    %v91 = vld [vmem:[#allocation4] sm:$0x1]
    %v92 = vadd.f32 %v69, %v70
    %v93 = vrot.slane %v92, 4
    %v94 = vadd.f32 %v92, %v93
    %v95 = vrot.slane %v94, 2
    %v96 = vadd.f32 %v94, %v95
    %v97 = vrot.slane %v96, 1
    %v98 = vadd.f32 %v96, %v97
    %v99 = vadd.f32 %v91, %v98
    %100 = vst [vmem:[#allocation4] sm:$0x1] %v99
    // Predicated region
    $region22: #{tpu_custom_call.1} parent=1 // pred_check
      %p101 = pneg %p40
    $region23: #{tpu_custom_call.1} parent=1 // pred_check_branch
      %103 = sbr.rel (%p101) target = $region25
    $region24: #{tpu_custom_call.1} parent=1 // pred_region
      %v104 = vld [vmem:[#allocation2] sm:$0x1]
      %vm105 = vcmask 1040384
      %v106 = vsel %vm105, %v104, 0.0
      %107 = vadd.xlane.f32.xlu0 %v106
      %v108 = vpop.xlane.xlu0 %107
      %v109 = vrot.slane %v108, 4
      %v110 = vadd.f32 %v108, %v109
      %v111 = vrot.slane %v110, 2
      %v112 = vadd.f32 %v110, %v111
      %v113 = vrot.slane %v112, 1
      %v114 = vadd.f32 %v112, %v113
      %s115 = vtos %v114
      %v116 = vld [vmem:[#allocation3] sm:$0x1]
      %v117 = vsel %vm105, %v116, 0.0
      %118 = vadd.xlane.f32.xlu0 %v117
      %v119 = vpop.xlane.xlu0 %118
      %v120 = vrot.slane %v119, 4
      %v121 = vadd.f32 %v119, %v120
      %v122 = vrot.slane %v121, 2
      %v123 = vadd.f32 %v121, %v122
      %v124 = vrot.slane %v123, 1
      %v125 = vadd.f32 %v123, %v124
      %s126 = vtos %v125
      %v127 = vld [vmem:[#allocation4] sm:$0x1]
      %v128 = vsel %vm105, %v127, 0.0
      %129 = vadd.xlane.f32.xlu0 %v128
      %v130 = vpop.xlane.xlu0 %129
      %v131 = vrot.slane %v130, 4
      %v132 = vadd.f32 %v130, %v131
      %v133 = vrot.slane %v132, 2
      %v134 = vadd.f32 %v132, %v133
      %v135 = vrot.slane %v134, 1
      %v136 = vadd.f32 %v134, %v135
      %s137 = vtos %v136
      %s138 = ssub.f32 2048.0, %s137
      %s139 = ssub.f32 %s115, %s126
      %v140 = vrcp.pop 2048.0
      %s141 = vtos %v140
      %s142 = smul.f32 %s115, %s141
      %s143 = smax.f32 %s137, 1.0
      %v144 = vstv %s143
      %v145 = vrcp.pop %v144
      %s146 = vtos %v145
      %s147 = smul.f32 1024.0, %s146
      %s148 = smax.f32 %s138, 1.0
      %v149 = vstv %s148
      %v150 = vrcp.pop %v149
      %s151 = vtos %v150
      %s152 = smul.f32 1024.0, %s151
      %s153 = smul.f32 %s147, %s126
      %s154 = smul.f32 %s152, %s139
      %s155 = sadd.f32 %s153, %s154
      %v156 = vrcp.pop 2048.0
      %s157 = vtos %v156
      %s158 = smul.f32 %s155, %s157
      %p159 = scmp.eq.f32.partialorder %s137, 0.0
      %p160 = scmp.eq.f32.partialorder %s138, 0.0
      %p161 = por %p159, %p160
      %s162 = scalar_select %p161, %s142, %s158
      %s163 = scalar_lea.smem [#allocation10], 0
      %164 = sst [smem:[%s163]] %s162
    $region25: #{tpu_custom_call.1} parent=1 // pred_fallthru
      _
    // Predicated region
    $region26: #{tpu_custom_call.1} parent=1 // pred_check
      _
    $region27: #{tpu_custom_call.1} parent=1 // pred_check_branch
      %166 = sbr.rel (0) target = $region29
    $region28: #{tpu_custom_call.1} parent=1 // pred_region
      %s168 = ssub.s32 16, 16
      %169 = vsyncadd [#allocation7], %s168
      %172 = dma.smem_to_hbm [#allocation10], 16, %s2, [#allocation7]
    $region29: #{tpu_custom_call.1} parent=1 // pred_fallthru
      _
    // Predicated region
    $region30: #{tpu_custom_call.1} parent=1 // pred_check
      _
    $region31: #{tpu_custom_call.1} parent=1 // pred_check_branch
      %174 = sbr.rel (0) target = $region33
    $region32: #{tpu_custom_call.1} parent=1 // pred_region
      %175 = dma.done [#allocation7], 16
    $region33: #{tpu_custom_call.1} parent=1 // pred_fallthru
      _
    %176 = sfence
    %177 = vsyncpa [#allocation6], 1
    %178 = vsyncpa [#allocation9], 1
    %179 = vsyncpa [#allocation7], 1

</llo_original>
